<compile_context>
chip_gen: v7x
topology: tpu7x:2x2x1
jax: 0.10.0
libtpu: 0.0.40
codegen_flags: <defaults>
</compile_context>

<pallas_src>
import jax
import jax.numpy as jnp
from jax.experimental import pallas as pl
from jax.experimental.pallas import tpu as pltpu

SUBLANE = 8   # f32: 8 rows per vreg sublane group


def slot_classifier_kernel(x_ref, w_ref, b_ref, o_ref):
    """One M-tile of: out = x @ W^T + b   (dropout p=0.0 is the identity).

    x_ref: (tm, H)  f32  activation rows for this grid step
    w_ref: (L, H)   f32  resident weight, torch nn.Linear layout (out, in)
    b_ref: (1, L)   f32  resident bias
    o_ref: (tm, L)  f32  exact-width output tile
    """
    acc = jax.lax.dot_general(
        x_ref[...], w_ref[...],
        dimension_numbers=(((1,), (1,)), ((), ())),   # contract H with H: no transpose op
        preferred_element_type=jnp.float32,
        precision=jax.lax.Precision.HIGHEST)          # full f32 MXU passes (K is tiny)
    o_ref[...] = (acc + b_ref[...]).astype(o_ref.dtype)


def _round_up(x, m):
    return ((x + m - 1) // m) * m


def _pick_row_tile(M, H, L, vmem_budget_bytes=12 * 1024 * 1024, tm_max=2048):
    """Row-tile size: multiple of 8 sublanes; budget covers the double-buffered
    x/out tiles *and* the resident (double-buffered) weight/bias, and the tile
    is capped so grid_m >= 2 whenever M allows (keeps both v7x TCs busy)."""
    resident = 2 * (L * H * 4) + 2 * (L * 4)          # weight + bias double buffers
    per_row = 2 * (H * 4) + 2 * (L * 4)               # f32 x rows + f32 out rows, 2x buffered
    budget = max(vmem_budget_bytes - resident, per_row * SUBLANE)
    tm = min(tm_max, budget // max(per_row, 1))
    # ensure at least 2 row tiles when possible so the "parallel" axis feeds both v7x TCs
    tm = min(tm, max(SUBLANE, _round_up(-(-M // 2), SUBLANE)))
    tm = max(SUBLANE, (tm // SUBLANE) * SUBLANE)
    return tm


@jax.jit
def slot_classifier_forward(x, weight, bias):
    """Pallas equivalent of SlotClassifierWithCRF.forward.

    Args:
      x:      (B, S, H) float32 activations.
      weight: (L, H)    float32 -- torch nn.Linear.weight layout.
      bias:   (L,)      float32 -- torch nn.Linear.bias layout.

    Returns:
      (B, S, L) float32 slot logits.
    """
    B, S, H = x.shape
    L = weight.shape[0]
    M = B * S

    x2 = x.reshape(M, H)                     # no dtype cast, no extra HBM pass
    b2 = bias.reshape(1, L).astype(jnp.float32)

    tm = _pick_row_tile(M, H, L)
    grid_m = pl.cdiv(M, tm)                  # ragged last block handled by Pallas edge masking

    # Real VMEM footprint (double-buffered tiles + resident weight/bias) + slack;
    # explicit limit keeps the same tiling valid on v5e/v6e/v7x scoped-VMEM defaults.
    footprint = 2 * tm * H * 4 + 2 * tm * L * 4 + 2 * L * H * 4 + 2 * L * 4
    vmem_limit = int(min(max(2 * footprint, 4 << 20), 32 << 20))

    cost = pl.CostEstimate(
        flops=2 * M * H * L,
        transcendentals=0,
        bytes_accessed=M * H * 4 + L * H * 4 + L * 4 + M * L * 4,
    )

    out = pl.pallas_call(
        slot_classifier_kernel,
        out_shape=jax.ShapeDtypeStruct((M, L), jnp.float32),
        grid=(grid_m,),
        in_specs=[
            pl.BlockSpec((tm, H), lambda i: (i, 0)),   # streamed activation rows (f32)
            pl.BlockSpec((L, H), lambda i: (0, 0)),    # weight resident across the grid
            pl.BlockSpec((1, L), lambda i: (0, 0)),    # bias resident across the grid
        ],
        out_specs=pl.BlockSpec((tm, L), lambda i: (i, 0)),   # exact (M, L), no lane padding
        compiler_params=pltpu.CompilerParams(
            dimension_semantics=("parallel",),         # shard row tiles over v7x's 2 TCs
            vmem_limit_bytes=vmem_limit,
        ),
        cost_estimate=cost,
    )(x2, weight, b2)

    return out.reshape(B, S, L)


if __name__ == "__main__":
    # Small shapes consistent with the module: batch=2, seq=8, hidden(input_dim)=32,
    # num_slot_labels=16.
    B, S, H, L = 2, 8, 32, 16

    key = jax.random.PRNGKey(0)
    kx, kw, kb = jax.random.split(key, 3)

    x = jax.random.normal(kx, (B, S, H), dtype=jnp.float32)
    weight = jax.random.normal(kw, (L, H), dtype=jnp.float32) * 0.05   # (num_slot_labels, input_dim)
    bias = jax.random.normal(kb, (L,), dtype=jnp.float32) * 0.05       # (num_slot_labels,)

    out = jax.block_until_ready(slot_classifier_forward(x, weight, bias))

    # Reference check in plain JAX (dropout p=0.0 is identity).
    ref = x @ weight.T + bias
    assert out.shape == (B, S, L), out.shape
    assert jnp.allclose(out, ref, atol=1e-3, rtol=1e-3), "mismatch vs reference"

    print("KERNEL_OK")
</pallas_src>

<mosaic_0001>
module attributes {stable_mosaic.version = 11 : i64} {
  func.func @slot_classifier_kernel(%arg0: i32, %arg1: memref<8x32xf32, #tpu.memory_space<vmem>>, %arg2: memref<16x32xf32, #tpu.memory_space<vmem>>, %arg3: memref<1x16xf32, #tpu.memory_space<vmem>>, %arg4: memref<8x16xf32, #tpu.memory_space<vmem>>) attributes {dimension_semantics = [#tpu.dimension_semantics<parallel>], iteration_bounds = array<i64: 2>, scalar_prefetch = 0 : i64, scratch_operands = 0 : i64, tpu.core_type = #tpu.core_type<tc>, window_params = [{transform_indices = @transform_0, window_bounds = array<i64: 8, 32>}, {pipeline_mode = #tpu.pipeline_mode<synchronous>, transform_indices = @transform_1, window_bounds = array<i64: 16, 32>}, {pipeline_mode = #tpu.pipeline_mode<synchronous>, transform_indices = @transform_2, window_bounds = array<i64: 1, 16>}, {transform_indices = @transform_3, window_bounds = array<i64: 8, 16>}]} {
    %c0 = arith.constant 0 : index
    %c0_0 = arith.constant 0 : index
    %0 = vector.load %arg1[%c0, %c0_0] : memref<8x32xf32, #tpu.memory_space<vmem>>, vector<8x32xf32>
    %c0_1 = arith.constant 0 : index
    %c0_2 = arith.constant 0 : index
    %1 = vector.load %arg2[%c0_1, %c0_2] : memref<16x32xf32, #tpu.memory_space<vmem>>, vector<16x32xf32>
    %cst = arith.constant dense<0.000000e+00> : vector<8x16xf32>
    %2 = tpu.matmul %0, %1, %cst {dimension_numbers = #tpu.dot_dimension_numbers<[1], [1], [0], [0], [0, 0, 1, 0], [], []>, precision = #tpu.contract_precision<fp32>} : vector<8x32xf32>, vector<16x32xf32>, vector<8x16xf32> -> vector<8x16xf32>
    %c0_3 = arith.constant 0 : index
    %c0_4 = arith.constant 0 : index
    %3 = vector.load %arg3[%c0_3, %c0_4] : memref<1x16xf32, #tpu.memory_space<vmem>>, vector<1x16xf32>
    %4 = vector.broadcast %3 : vector<1x16xf32> to vector<8x16xf32>
    %5 = arith.addf %2, %4 : vector<8x16xf32>
    %c0_5 = arith.constant 0 : index
    %c0_6 = arith.constant 0 : index
    %6 = vector.load %arg4[%c0_5, %c0_6] : memref<8x16xf32, #tpu.memory_space<vmem>>, vector<8x16xf32>
    tpu.vector_store %arg4[%c0_5, %c0_6], %5 {strides = array<i32>} : memref<8x16xf32, #tpu.memory_space<vmem>>, vector<8x16xf32>,
    return
  }
  func.func @transform_0(%arg0: i32) -> (i32, i32) {
    %c0_i32 = arith.constant 0 : i32
    %c0_i32_0 = arith.constant 0 : i32
    return %arg0, %c0_i32 : i32, i32
  }
  func.func @transform_1(%arg0: i32) -> (i32, i32) {
    %c0_i32 = arith.constant 0 : i32
    %c0_i32_0 = arith.constant 0 : i32
    %c0_i32_1 = arith.constant 0 : i32
    return %c0_i32, %c0_i32_0 : i32, i32
  }
  func.func @transform_2(%arg0: i32) -> (i32, i32) {
    %c0_i32 = arith.constant 0 : i32
    %c0_i32_0 = arith.constant 0 : i32
    %c0_i32_1 = arith.constant 0 : i32
    return %c0_i32, %c0_i32_0 : i32, i32
  }
  func.func @transform_3(%arg0: i32) -> (i32, i32) {
    %c0_i32 = arith.constant 0 : i32
    %c0_i32_0 = arith.constant 0 : i32
    return %arg0, %c0_i32 : i32, i32
  }
}

</mosaic_0001>

<llo_original>
// kernel: slot_classifier_forward.1
$region0: #{slot_classifier_forward.1}
  #allocation0 [shape = 'u32[]', space=smem, size = 0x4, offset = 0x4, fixed_abs, tag = 'smem constant byte address 0x4 - core index']
  #allocation1 [shape = 'u32[144,128]{1,0:T(1,128)}', space=vmem, size = 0x12000, scoped, tag = 'internal scratch']
  %s0 = inlined_call_operand.hbm [shape: f32[16,32], index: 0, kind: input, shape index: {}]
  %s1 = inlined_call_operand.hbm [shape: f32[16,32], index: 1, kind: input, shape index: {}]
  %s2 = inlined_call_operand.vmem [shape: f32[1,16], index: 2, kind: input, shape index: {}]
  %s3 = inlined_call_operand.hbm [shape: f32[16,16], index: 3, kind: output, shape index: {}]
  %s4 = sld [smem:[#allocation0]]
  $region53: #{slot_classifier_forward.1} parent=0
    _
  %s6 = ssub.s32 1, %s4
  %s7 = scalar_select 0, %s6, %s4
  $region1: #{slot_classifier_forward.1} parent=0
    #allocation2 [shape = 'u8[8192]{0}', space=vmem, size = 0x2000, scoped, tag = 'input window, operand 0']
    #allocation3 [shape = 's32[2]{0}', space=sflag, size = 0x8, scoped, tag = 'scoped memory for slot_classifier_forward.1']
    #allocation4 [shape = 's32[2]{0}', space=sflag, size = 0x8, scoped, tag = 'scoped memory for slot_classifier_forward.1']
    #allocation5 [shape = 'u8[8192]{0}', space=vmem, size = 0x2000, scoped, tag = 'input window, operand 1, single buffered']
    #allocation6 [shape = 's32[1]{0}', space=sflag, size = 0x4, scoped, tag = 'scoped memory for slot_classifier_forward.1']
    #allocation7 [shape = 'u8[8192]{0}', space=vmem, size = 0x2000, scoped, tag = 'output window, operand 0']
    %8 = vsyncpa [#allocation3], 0
    %s9 = scalar_lea.sflag [#allocation3], 1
    %10 = vsyncpa %s9, 0
    %11 = vsyncpa [#allocation6], 0
    %12 = vsyncpa [#allocation4], 0
    %s13 = scalar_lea.sflag [#allocation4], 1
    %14 = vsyncpa %s13, 0
    loop: start=0, step=1, limit=4
    $region2: #{slot_classifier_forward.1} parent=1 // loop_pre_header
      _
    $region3: #{slot_classifier_forward.1} parent=1 // loop_header
      %s16 = sphi 0, %s20
      %p17 = scmp.ge.s32.totalorder %s16, 4
      %s26 = sphi 0, %s28
      %s29 = sphi 0, %s26
      %s30 = sphi 0, %s29
      %s46 = sphi 0, %s30
      %s50 = sphi 0, %s50
      %s52 = sphi 0, %s50
      %s53 = sphi 0, %s52
      %s67 = sphi 0, %s53
      %s71 = sphi 0, %s71
      %s73 = sphi 0, %s71
      %s74 = sphi 0, %s73
      %s88 = sphi 0, %s74
      %s94 = sphi 0, %s96
      %s97 = sphi 0, %s94
      %s98 = sphi 0, %s97
      %s114 = sphi 0, %s98
    $region4: #{slot_classifier_forward.1} parent=1 // loop_header_branch
      %19 = sbr.rel (%p17) target = $region8
    $region5: #{slot_classifier_forward.1} parent=1 // loop_body
      %s21 = ssub.s32 %s16, 1
      %s22 = ssub.s32 %s16, 2
      %s23 = sadd.s32 %s16, 1
      %s24 = ssub.s32 %s16, %s23
      %p25 = scmp.eq.s32.totalorder %s24, 0
      %s27 = sadd.s32 %s26, 1
      %s28 = scalar_select %p25, %s26, %s27
      %p31 = pneg %p25
      %p32 = scmp.eq.s32.totalorder %s16, 1
      %p33 = por %p31, %p32
      %p34 = scmp.ne.s32.totalorder %s26, %s29
      %p35 = scmp.eq.s32.totalorder %s16, 0
      %p36 = por %p34, %p35
      %p37 = scmp.ne.s32.totalorder %s26, %s29
      %p38 = scmp.eq.s32.totalorder %s21, 1
      %p39 = por %p37, %p38
      %p40 = scmp.ne.s32.totalorder %s29, %s30
      %p41 = scmp.eq.s32.totalorder %s21, 0
      %p42 = por %p40, %p41
      %p43 = scmp.ne.s32.totalorder %s29, %s30
      %p44 = scmp.eq.s32.totalorder %s22, 1
      %p45 = por %p43, %p44
      %p47 = scmp.ne.s32.totalorder %s30, %s46
      %p48 = scmp.eq.s32.totalorder %s22, 0
      %p49 = por %p47, %p48
      %s51 = sadd.s32 %s50, 1
      %p54 = scmp.eq.s32.totalorder %s16, 1
      %p55 = scmp.ne.s32.totalorder %s50, %s52
      %p56 = scmp.eq.s32.totalorder %s16, 0
      %p57 = por %p55, %p56
      %p58 = scmp.ne.s32.totalorder %s50, %s52
      %p59 = scmp.eq.s32.totalorder %s21, 1
      %p60 = por %p58, %p59
      %p61 = scmp.ne.s32.totalorder %s52, %s53
      %p62 = scmp.eq.s32.totalorder %s21, 0
      %p63 = por %p61, %p62
      %p64 = scmp.ne.s32.totalorder %s52, %s53
      %p65 = scmp.eq.s32.totalorder %s22, 1
      %p66 = por %p64, %p65
      %p68 = scmp.ne.s32.totalorder %s53, %s67
      %p69 = scmp.eq.s32.totalorder %s22, 0
      %p70 = por %p68, %p69
      %s72 = sadd.s32 %s71, 1
      %p75 = scmp.eq.s32.totalorder %s16, 1
      %p76 = scmp.ne.s32.totalorder %s71, %s73
      %p77 = scmp.eq.s32.totalorder %s16, 0
      %p78 = por %p76, %p77
      %p79 = scmp.ne.s32.totalorder %s71, %s73
      %p80 = scmp.eq.s32.totalorder %s21, 1
      %p81 = por %p79, %p80
      %p82 = scmp.ne.s32.totalorder %s73, %s74
      %p83 = scmp.eq.s32.totalorder %s21, 0
      %p84 = por %p82, %p83
      %p85 = scmp.ne.s32.totalorder %s73, %s74
      %p86 = scmp.eq.s32.totalorder %s22, 1
      %p87 = por %p85, %p86
      %p89 = scmp.ne.s32.totalorder %s74, %s88
      %p90 = scmp.eq.s32.totalorder %s22, 0
      %p91 = por %p89, %p90
      %s92 = ssub.s32 %s16, %s23
      %p93 = scmp.eq.s32.totalorder %s92, 0
      %s95 = sadd.s32 %s94, 1
      %s96 = scalar_select %p93, %s94, %s95
      %p99 = pneg %p93
      %p100 = scmp.eq.s32.totalorder %s16, 1
      %p101 = por %p99, %p100
      %p102 = scmp.ne.s32.totalorder %s94, %s97
      %p103 = scmp.eq.s32.totalorder %s16, 0
      %p104 = por %p102, %p103
      %p105 = scmp.ne.s32.totalorder %s94, %s97
      %p106 = scmp.eq.s32.totalorder %s21, 1
      %p107 = por %p105, %p106
      %p108 = scmp.ne.s32.totalorder %s97, %s98
      %p109 = scmp.eq.s32.totalorder %s21, 0
      %p110 = por %p108, %p109
      %p111 = scmp.ne.s32.totalorder %s97, %s98
      %p112 = scmp.eq.s32.totalorder %s22, 1
      %p113 = por %p111, %p112
      %p115 = scmp.ne.s32.totalorder %s98, %s114
      %p116 = scmp.eq.s32.totalorder %s22, 0
      %p117 = por %p115, %p116
      %p118 = scmp.le.s32.totalorder 1, %s16
      %p119 = scmp.lt.s32.totalorder %s16, 3
      %p120 = pnand %p118, %p119
      %p121 = pneg %p120
      // Predicated region
      $region9: #{slot_classifier_forward.1} parent=5 // pred_check
        _
      $region10: #{slot_classifier_forward.1} parent=5 // pred_check_branch
        %123 = sbr.rel (%p120) target = $region12
      $region11: #{slot_classifier_forward.1} parent=5 // pred_region
        %s124 = ssub.s32 %s16, 1
        // Predicated region
        $region13: #{slot_classifier_forward.1} parent=11 // pred_check
          %p125 = pneg %p63
        $region14: #{slot_classifier_forward.1} parent=11 // pred_check_branch
          %127 = sbr.rel (%p125) target = $region16
        $region15: #{slot_classifier_forward.1} parent=11 // pred_region
          %s129 = ssub.s32 256, 256
          %130 = vsyncadd [#allocation6], %s129
          %s131 = sshll.u32 [#allocation5], 4
          %s132 = int_to_ptr.vmem [resolvable:$true] %s131
          %137 = dma.hbm_to_vmem [thread:$0]  %s1, 256, %s132, [#allocation6], 128, 128, 8
        $region16: #{slot_classifier_forward.1} parent=11 // pred_fallthru
          _
        // Predicated region
        $region17: #{slot_classifier_forward.1} parent=11 // pred_check
          %p138 = pneg %p84
        $region18: #{slot_classifier_forward.1} parent=11 // pred_check_branch
          %140 = sbr.rel (%p138) target = $region20
        $region19: #{slot_classifier_forward.1} parent=11 // pred_region
          _
        $region20: #{slot_classifier_forward.1} parent=11 // pred_fallthru
          _
      $region12: #{slot_classifier_forward.1} parent=5 // pred_fallthru
        _
      %p141 = scmp.lt.s32.totalorder %s16, 2
      // Predicated region
      $region21: #{slot_classifier_forward.1} parent=5 // pred_check
        %p142 = pneg %p141
      $region22: #{slot_classifier_forward.1} parent=5 // pred_check_branch
        %144 = sbr.rel (%p142) target = $region24
      $region23: #{slot_classifier_forward.1} parent=5 // pred_region
        // Predicated region
        $region25: #{slot_classifier_forward.1} parent=23 // pred_check
          %p145 = pneg %p36
        $region26: #{slot_classifier_forward.1} parent=23 // pred_check_branch
          %147 = sbr.rel (%p145) target = $region28
        $region27: #{slot_classifier_forward.1} parent=23 // pred_region
          %s148 = sand.u32 %s26, 1
          %s149 = scalar_lea.sflag [#allocation3], %s148
          %s150 = sand.u32 %s26, 1
          %s151 = smul.addr %s150, 8
          %s152 = scalar_lea.vmem [#allocation2], %s151
          %s154 = ssub.s32 128, 128
          %155 = vsyncadd %s149, %s154
          %s156 = smul.addr %s16, 128
          %s157 = scalar_lea.hbm %s0, %s156
          %s159 = sshll.u32 %s152, 4
          %s160 = int_to_ptr.vmem [resolvable:$true] %s159
          %162 = dma.hbm_to_vmem [thread:$0]  %s157, 128, %s160, %s149
        $region28: #{slot_classifier_forward.1} parent=23 // pred_fallthru
          _
      $region24: #{slot_classifier_forward.1} parent=5 // pred_fallthru
        _
      %p163 = scmp.le.s32.totalorder 1, %s16
      %p164 = scmp.lt.s32.totalorder %s16, 3
      %p165 = pnand %p163, %p164
      %p166 = pneg %p165
      // Predicated region
      $region29: #{slot_classifier_forward.1} parent=5 // pred_check
        _
      $region30: #{slot_classifier_forward.1} parent=5 // pred_check_branch
        %168 = sbr.rel (%p165) target = $region32
      $region31: #{slot_classifier_forward.1} parent=5 // pred_region
        %s169 = ssub.s32 %s16, 1
        %s170 = sand.u32 %s29, 1
        %s171 = scalar_lea.sflag [#allocation3], %s170
        %s172 = sand.u32 %s29, 1
        %s173 = smul.addr %s172, 8
        %s174 = scalar_lea.vmem [#allocation2], %s173
        // Predicated region
        $region33: #{slot_classifier_forward.1} parent=31 // pred_check
          %p175 = pneg %p42
        $region34: #{slot_classifier_forward.1} parent=31 // pred_check_branch
          %177 = sbr.rel (%p175) target = $region36
        $region35: #{slot_classifier_forward.1} parent=31 // pred_region
          %178 = dma.done %s171, 128
        $region36: #{slot_classifier_forward.1} parent=31 // pred_fallthru
          _
        // Predicated region
        $region37: #{slot_classifier_forward.1} parent=31 // pred_check
          %p179 = pneg %p63
        $region38: #{slot_classifier_forward.1} parent=31 // pred_check_branch
          %181 = sbr.rel (%p179) target = $region40
        $region39: #{slot_classifier_forward.1} parent=31 // pred_region
          %182 = dma.done [#allocation6], 256
        $region40: #{slot_classifier_forward.1} parent=31 // pred_fallthru
          _
        %s183 = sand.u32 %s29, 1
        %s184 = scalar_lea.sflag [#allocation3], %s183
        %s185 = sand.u32 %s29, 1
        %s186 = smul.addr %s185, 8
        %s187 = scalar_lea.vmem [#allocation2], %s186
        %p188 = pneg %p42
        %p189 = pneg %p39
        %p190 = pneg %p63
        %p191 = pneg %p60
        %p192 = pneg %p84
        %p193 = pneg %p81
        %p194 = pneg %p110
        %p195 = pneg %p107
        %s196 = sand.u32 %s97, 1
        %s197 = scalar_lea.sflag [#allocation4], %s196
        %s198 = sand.u32 %s97, 1
        %s199 = smul.addr %s198, 8
        %s200 = scalar_lea.vmem [#allocation7], %s199
        %v201 = vld [vmem:[%s174] sm:$0xff]
        %v202 = vld [vmem:[#allocation5] sm:$0xff]
        %v203 = vld [vmem:[#allocation5 + $0x8] sm:$0xff]
        %v204 = vld [vmem:[%s2] sm:$0x1]
        %v206 = vlaneseq
        %v207 = vshrl.u32 %v206, 7
        %v208 = vsub.s32 0, %v207
        %v209 = vrot.slane %v204, %v208
        %vm211 = vcmask 261120
        %v213 = vsel %vm211, %v201, 0
        %v216 = vsel %vm211, %v202, 0
        %v219 = vsel %vm211, %v203, 0
        %221 = vmatprep.subr.mxu0 0.0
        %v222 = vand.u32 %v216, 4294901760
        %223 = vmatpush1.xpose.msra.mxu0 %v222
        %224 = vmatprep.subr.mxu0 0.0
        %v225 = vand.u32 %v219, 4294901760
        %226 = vmatpush1.xpose.msra.mxu0 %v225
        %227 = vmatprep.subr.mxu0 0.0
        %228 = vmatpush1.xpose.msra.mxu0 0.0
        %229 = vmatprep.subr.mxu0 0.0
        %230 = vmatpush1.xpose.msra.mxu0 0.0
        %231 = vmatprep.subr.mxu0 0.0
        %232 = vmatpush1.xpose.msra.mxu0 0.0
        %233 = vmatprep.subr.mxu0 0.0
        %234 = vmatpush1.xpose.msra.mxu0 0.0
        %235 = vmatprep.subr.mxu0 0.0
        %236 = vmatpush1.xpose.msra.mxu0 0.0
        %237 = vmatprep.subr.mxu0 0.0
        %238 = vmatpush1.xpose.msra.mxu0 0.0
        %239 = vmatprep.subr.mxu0 0.0
        %240 = vmatpush1.xpose.msra.mxu0 0.0
        %241 = vmatprep.subr.mxu0 0.0
        %242 = vmatpush1.xpose.msra.mxu0 0.0
        %243 = vmatprep.subr.mxu0 0.0
        %244 = vmatpush1.xpose.msra.mxu0 0.0
        %245 = vmatprep.subr.mxu0 0.0
        %246 = vmatpush1.xpose.msra.mxu0 0.0
        %247 = vmatprep.subr.mxu0 0.0
        %248 = vmatpush1.xpose.msra.mxu0 0.0
        %249 = vmatprep.subr.mxu0 0.0
        %250 = vmatpush1.xpose.msra.mxu0 0.0
        %251 = vmatprep.subr.mxu0 0.0
        %252 = vmatpush1.xpose.msra.mxu0 0.0
        %253 = vmatprep.subr.mxu0 0.0
        %254 = vmatpush1.xpose.msra.mxu0 0.0
        %255 = vmatprep.subr.mxu0 0.0
        %256 = vmatpush1.xpose.msra.mxu0 0.0
        %257 = vmatprep.subr.mxu0 0.0
        %258 = vmatpush1.xpose.msra.mxu0 0.0
        %259 = vmatprep.subr.mxu0 0.0
        %260 = vmatpush1.xpose.msra.mxu0 0.0
        %261 = vmatprep.subr.mxu0 0.0
        %262 = vmatpush1.xpose.msra.mxu0 0.0
        %263 = vmatprep.subr.mxu0 0.0
        %264 = vmatpush1.xpose.msra.mxu0 0.0
        %265 = vmatprep.subr.mxu0 0.0
        %266 = vmatpush1.xpose.msra.mxu0 0.0
        %267 = vmatprep.subr.mxu0 0.0
        %268 = vmatpush1.xpose.msra.mxu0 0.0
        %269 = vmatprep.subr.mxu0 0.0
        %270 = vmatpush1.xpose.msra.mxu0 0.0
        %271 = vmatprep.subr.mxu0 0.0
        %272 = vmatpush1.xpose.msra.mxu0 0.0
        %273 = vmatprep.subr.mxu0 0.0
        %274 = vmatpush1.xpose.msra.mxu0 0.0
        %275 = vmatprep.subr.mxu0 0.0
        %276 = vmatpush1.xpose.msra.mxu0 0.0
        %277 = vmatprep.subr.mxu0 0.0
        %278 = vmatpush1.xpose.msra.mxu0 0.0
        %279 = vmatprep.subr.mxu0 0.0
        %280 = vmatpush1.xpose.msra.mxu0 0.0
        %281 = vmatprep.subr.mxu0 0.0
        %282 = vmatpush1.xpose.msra.mxu0 0.0
        %283 = vmatprep.subr.mxu0 0.0
        %284 = vmatpush1.xpose.msra.mxu0 0.0
        %285 = vmatprep.subr.mxu0 0.0
        %286 = vmatpush1.xpose.msra.mxu0 0.0
        %287 = vmatprep.mubr.f32.mxu0 0.0
        %v288 = vand.u32 %v213, 4294901760
        %v289 = vsub.f32 %v213, %v288
        %v290 = vand.u32 %v289, 4294901760
        %v291 = vsub.f32 %v289, %v290
        %v292 = vand.u32 %v291, 4294901760
        %293 = vmatmul.mubr.f32.gmra.mrb[0].mxu0 %v292
        %v294 = vpop.f32.mrb[0].mxu0
        %v295 = vadd.f32 %v209, %v294
        %v296 = vpop.f32.mrb[0].mxu0
        %297 = vdwg.mxu0
        %298 = vmatprep.subr.mxu0 0.0
        %v299 = vand.u32 %v216, 4294901760
        %v300 = vsub.f32 %v216, %v299
        %v301 = vand.u32 %v300, 4294901760
        %v302 = vsub.f32 %v300, %v301
        %v303 = vand.u32 %v302, 4294901760
        %304 = vmatpush1.xpose.msra.mxu0 %v303
        %305 = vmatprep.subr.mxu0 0.0
        %v306 = vand.u32 %v219, 4294901760
        %v307 = vsub.f32 %v219, %v306
        %v308 = vand.u32 %v307, 4294901760
        %v309 = vsub.f32 %v307, %v308
        %v310 = vand.u32 %v309, 4294901760
        %311 = vmatpush1.xpose.msra.mxu0 %v310
        %312 = vmatprep.subr.mxu0 0.0
        %313 = vmatpush1.xpose.msra.mxu0 0.0
        %314 = vmatprep.subr.mxu0 0.0
        %315 = vmatpush1.xpose.msra.mxu0 0.0
        %316 = vmatprep.subr.mxu0 0.0
        %317 = vmatpush1.xpose.msra.mxu0 0.0
        %318 = vmatprep.subr.mxu0 0.0
        %319 = vmatpush1.xpose.msra.mxu0 0.0
        %320 = vmatprep.subr.mxu0 0.0
        %321 = vmatpush1.xpose.msra.mxu0 0.0
        %322 = vmatprep.subr.mxu0 0.0
        %323 = vmatpush1.xpose.msra.mxu0 0.0
        %324 = vmatprep.subr.mxu0 0.0
        %325 = vmatpush1.xpose.msra.mxu0 0.0
        %326 = vmatprep.subr.mxu0 0.0
        %327 = vmatpush1.xpose.msra.mxu0 0.0
        %328 = vmatprep.subr.mxu0 0.0
        %329 = vmatpush1.xpose.msra.mxu0 0.0
        %330 = vmatprep.subr.mxu0 0.0
        %331 = vmatpush1.xpose.msra.mxu0 0.0
        %332 = vmatprep.subr.mxu0 0.0
        %333 = vmatpush1.xpose.msra.mxu0 0.0
        %334 = vmatprep.subr.mxu0 0.0
        %335 = vmatpush1.xpose.msra.mxu0 0.0
        %336 = vmatprep.subr.mxu0 0.0
        %337 = vmatpush1.xpose.msra.mxu0 0.0
        %338 = vmatprep.subr.mxu0 0.0
        %339 = vmatpush1.xpose.msra.mxu0 0.0
        %340 = vmatprep.subr.mxu0 0.0
        %341 = vmatpush1.xpose.msra.mxu0 0.0
        %342 = vmatprep.subr.mxu0 0.0
        %343 = vmatpush1.xpose.msra.mxu0 0.0
        %344 = vmatprep.subr.mxu0 0.0
        %345 = vmatpush1.xpose.msra.mxu0 0.0
        %346 = vmatprep.subr.mxu0 0.0
        %347 = vmatpush1.xpose.msra.mxu0 0.0
        %348 = vmatprep.subr.mxu0 0.0
        %349 = vmatpush1.xpose.msra.mxu0 0.0
        %350 = vmatprep.subr.mxu0 0.0
        %351 = vmatpush1.xpose.msra.mxu0 0.0
        %352 = vmatprep.subr.mxu0 0.0
        %353 = vmatpush1.xpose.msra.mxu0 0.0
        %354 = vmatprep.subr.mxu0 0.0
        %355 = vmatpush1.xpose.msra.mxu0 0.0
        %356 = vmatprep.subr.mxu0 0.0
        %357 = vmatpush1.xpose.msra.mxu0 0.0
        %358 = vmatprep.subr.mxu0 0.0
        %359 = vmatpush1.xpose.msra.mxu0 0.0
        %360 = vmatprep.subr.mxu0 0.0
        %361 = vmatpush1.xpose.msra.mxu0 0.0
        %362 = vmatprep.subr.mxu0 0.0
        %363 = vmatpush1.xpose.msra.mxu0 0.0
        %364 = vmatprep.subr.mxu0 0.0
        %365 = vmatpush1.xpose.msra.mxu0 0.0
        %366 = vmatprep.subr.mxu0 0.0
        %367 = vmatpush1.xpose.msra.mxu0 0.0
        %368 = vmatprep.subr.mxu0 0.0
        %369 = vmatpush1.xpose.msra.mxu0 0.0
        %370 = vmatprep.subr.mxu0 0.0
        %371 = vmatpush1.xpose.msra.mxu0 0.0
        %372 = vmatprep.mubr.f32.mxu0 0.0
        %v373 = vand.u32 %v213, 4294901760
        %374 = vmatmul.mubr.f32.gmra.mrb[0].mxu0 %v373
        %v375 = vpop.f32.mrb[0].mxu0
        %v376 = vadd.f32 %v295, %v375
        %v377 = vpop.f32.mrb[0].mxu0
        %378 = vdwg.mxu0
        %379 = vmatprep.subr.mxu0 0.0
        %v380 = vand.u32 %v216, 4294901760
        %v381 = vsub.f32 %v216, %v380
        %382 = vmatpush1.xpose.msra.mxu0 %v381
        %383 = vmatprep.subr.mxu0 0.0
        %v384 = vand.u32 %v219, 4294901760
        %v385 = vsub.f32 %v219, %v384
        %386 = vmatpush1.xpose.msra.mxu0 %v385
        %387 = vmatprep.subr.mxu0 0.0
        %388 = vmatpush1.xpose.msra.mxu0 0.0
        %389 = vmatprep.subr.mxu0 0.0
        %390 = vmatpush1.xpose.msra.mxu0 0.0
        %391 = vmatprep.subr.mxu0 0.0
        %392 = vmatpush1.xpose.msra.mxu0 0.0
        %393 = vmatprep.subr.mxu0 0.0
        %394 = vmatpush1.xpose.msra.mxu0 0.0
        %395 = vmatprep.subr.mxu0 0.0
        %396 = vmatpush1.xpose.msra.mxu0 0.0
        %397 = vmatprep.subr.mxu0 0.0
        %398 = vmatpush1.xpose.msra.mxu0 0.0
        %399 = vmatprep.subr.mxu0 0.0
        %400 = vmatpush1.xpose.msra.mxu0 0.0
        %401 = vmatprep.subr.mxu0 0.0
        %402 = vmatpush1.xpose.msra.mxu0 0.0
        %403 = vmatprep.subr.mxu0 0.0
        %404 = vmatpush1.xpose.msra.mxu0 0.0
        %405 = vmatprep.subr.mxu0 0.0
        %406 = vmatpush1.xpose.msra.mxu0 0.0
        %407 = vmatprep.subr.mxu0 0.0
        %408 = vmatpush1.xpose.msra.mxu0 0.0
        %409 = vmatprep.subr.mxu0 0.0
        %410 = vmatpush1.xpose.msra.mxu0 0.0
        %411 = vmatprep.subr.mxu0 0.0
        %412 = vmatpush1.xpose.msra.mxu0 0.0
        %413 = vmatprep.subr.mxu0 0.0
        %414 = vmatpush1.xpose.msra.mxu0 0.0
        %415 = vmatprep.subr.mxu0 0.0
        %416 = vmatpush1.xpose.msra.mxu0 0.0
        %417 = vmatprep.subr.mxu0 0.0
        %418 = vmatpush1.xpose.msra.mxu0 0.0
        %419 = vmatprep.subr.mxu0 0.0
        %420 = vmatpush1.xpose.msra.mxu0 0.0
        %421 = vmatprep.subr.mxu0 0.0
        %422 = vmatpush1.xpose.msra.mxu0 0.0
        %423 = vmatprep.subr.mxu0 0.0
        %424 = vmatpush1.xpose.msra.mxu0 0.0
        %425 = vmatprep.subr.mxu0 0.0
        %426 = vmatpush1.xpose.msra.mxu0 0.0
        %427 = vmatprep.subr.mxu0 0.0
        %428 = vmatpush1.xpose.msra.mxu0 0.0
        %429 = vmatprep.subr.mxu0 0.0
        %430 = vmatpush1.xpose.msra.mxu0 0.0
        %431 = vmatprep.subr.mxu0 0.0
        %432 = vmatpush1.xpose.msra.mxu0 0.0
        %433 = vmatprep.subr.mxu0 0.0
        %434 = vmatpush1.xpose.msra.mxu0 0.0
        %435 = vmatprep.subr.mxu0 0.0
        %436 = vmatpush1.xpose.msra.mxu0 0.0
        %437 = vmatprep.subr.mxu0 0.0
        %438 = vmatpush1.xpose.msra.mxu0 0.0
        %439 = vmatprep.subr.mxu0 0.0
        %440 = vmatpush1.xpose.msra.mxu0 0.0
        %441 = vmatprep.subr.mxu0 0.0
        %442 = vmatpush1.xpose.msra.mxu0 0.0
        %443 = vmatprep.subr.mxu0 0.0
        %444 = vmatpush1.xpose.msra.mxu0 0.0
        %445 = vmatprep.subr.mxu0 0.0
        %446 = vmatpush1.xpose.msra.mxu0 0.0
        %447 = vmatprep.mubr.f32.mxu0 0.0
        %v448 = vand.u32 %v213, 4294901760
        %v449 = vsub.f32 %v213, %v448
        %450 = vmatmul.mubr.f32.gmra.mrb[0].mxu0 %v449
        %v451 = vpop.f32.mrb[0].mxu0
        %v452 = vadd.f32 %v376, %v451
        %v453 = vpop.f32.mrb[0].mxu0
        %454 = vdwg.mxu0
        %455 = vmatprep.subr.mxu0 0.0
        %v456 = vand.u32 %v216, 4294901760
        %457 = vmatpush1.xpose.msra.mxu0 %v456
        %458 = vmatprep.subr.mxu0 0.0
        %v459 = vand.u32 %v219, 4294901760
        %460 = vmatpush1.xpose.msra.mxu0 %v459
        %461 = vmatprep.subr.mxu0 0.0
        %462 = vmatpush1.xpose.msra.mxu0 0.0
        %463 = vmatprep.subr.mxu0 0.0
        %464 = vmatpush1.xpose.msra.mxu0 0.0
        %465 = vmatprep.subr.mxu0 0.0
        %466 = vmatpush1.xpose.msra.mxu0 0.0
        %467 = vmatprep.subr.mxu0 0.0
        %468 = vmatpush1.xpose.msra.mxu0 0.0
        %469 = vmatprep.subr.mxu0 0.0
        %470 = vmatpush1.xpose.msra.mxu0 0.0
        %471 = vmatprep.subr.mxu0 0.0
        %472 = vmatpush1.xpose.msra.mxu0 0.0
        %473 = vmatprep.subr.mxu0 0.0
        %474 = vmatpush1.xpose.msra.mxu0 0.0
        %475 = vmatprep.subr.mxu0 0.0
        %476 = vmatpush1.xpose.msra.mxu0 0.0
        %477 = vmatprep.subr.mxu0 0.0
        %478 = vmatpush1.xpose.msra.mxu0 0.0
        %479 = vmatprep.subr.mxu0 0.0
        %480 = vmatpush1.xpose.msra.mxu0 0.0
        %481 = vmatprep.subr.mxu0 0.0
        %482 = vmatpush1.xpose.msra.mxu0 0.0
        %483 = vmatprep.subr.mxu0 0.0
        %484 = vmatpush1.xpose.msra.mxu0 0.0
        %485 = vmatprep.subr.mxu0 0.0
        %486 = vmatpush1.xpose.msra.mxu0 0.0
        %487 = vmatprep.subr.mxu0 0.0
        %488 = vmatpush1.xpose.msra.mxu0 0.0
        %489 = vmatprep.subr.mxu0 0.0
        %490 = vmatpush1.xpose.msra.mxu0 0.0
        %491 = vmatprep.subr.mxu0 0.0
        %492 = vmatpush1.xpose.msra.mxu0 0.0
        %493 = vmatprep.subr.mxu0 0.0
        %494 = vmatpush1.xpose.msra.mxu0 0.0
        %495 = vmatprep.subr.mxu0 0.0
        %496 = vmatpush1.xpose.msra.mxu0 0.0
        %497 = vmatprep.subr.mxu0 0.0
        %498 = vmatpush1.xpose.msra.mxu0 0.0
        %499 = vmatprep.subr.mxu0 0.0
        %500 = vmatpush1.xpose.msra.mxu0 0.0
        %501 = vmatprep.subr.mxu0 0.0
        %502 = vmatpush1.xpose.msra.mxu0 0.0
        %503 = vmatprep.subr.mxu0 0.0
        %504 = vmatpush1.xpose.msra.mxu0 0.0
        %505 = vmatprep.subr.mxu0 0.0
        %506 = vmatpush1.xpose.msra.mxu0 0.0
        %507 = vmatprep.subr.mxu0 0.0
        %508 = vmatpush1.xpose.msra.mxu0 0.0
        %509 = vmatprep.subr.mxu0 0.0
        %510 = vmatpush1.xpose.msra.mxu0 0.0
        %511 = vmatprep.subr.mxu0 0.0
        %512 = vmatpush1.xpose.msra.mxu0 0.0
        %513 = vmatprep.subr.mxu0 0.0
        %514 = vmatpush1.xpose.msra.mxu0 0.0
        %515 = vmatprep.subr.mxu0 0.0
        %516 = vmatpush1.xpose.msra.mxu0 0.0
        %517 = vmatprep.subr.mxu0 0.0
        %518 = vmatpush1.xpose.msra.mxu0 0.0
        %519 = vmatprep.subr.mxu0 0.0
        %520 = vmatpush1.xpose.msra.mxu0 0.0
        %521 = vmatprep.mubr.f32.mxu0 0.0
        %v522 = vand.u32 %v213, 4294901760
        %v523 = vsub.f32 %v213, %v522
        %v524 = vand.u32 %v523, 4294901760
        %525 = vmatmul.mubr.f32.gmra.mrb[0].mxu0 %v524
        %v526 = vpop.f32.mrb[0].mxu0
        %v527 = vadd.f32 %v452, %v526
        %v528 = vpop.f32.mrb[0].mxu0
        %529 = vdwg.mxu0
        %530 = vmatprep.subr.mxu0 0.0
        %v531 = vand.u32 %v216, 4294901760
        %v532 = vsub.f32 %v216, %v531
        %v533 = vand.u32 %v532, 4294901760
        %534 = vmatpush1.xpose.msra.mxu0 %v533
        %535 = vmatprep.subr.mxu0 0.0
        %v536 = vand.u32 %v219, 4294901760
        %v537 = vsub.f32 %v219, %v536
        %v538 = vand.u32 %v537, 4294901760
        %539 = vmatpush1.xpose.msra.mxu0 %v538
        %540 = vmatprep.subr.mxu0 0.0
        %541 = vmatpush1.xpose.msra.mxu0 0.0
        %542 = vmatprep.subr.mxu0 0.0
        %543 = vmatpush1.xpose.msra.mxu0 0.0
        %544 = vmatprep.subr.mxu0 0.0
        %545 = vmatpush1.xpose.msra.mxu0 0.0
        %546 = vmatprep.subr.mxu0 0.0
        %547 = vmatpush1.xpose.msra.mxu0 0.0
        %548 = vmatprep.subr.mxu0 0.0
        %549 = vmatpush1.xpose.msra.mxu0 0.0
        %550 = vmatprep.subr.mxu0 0.0
        %551 = vmatpush1.xpose.msra.mxu0 0.0
        %552 = vmatprep.subr.mxu0 0.0
        %553 = vmatpush1.xpose.msra.mxu0 0.0
        %554 = vmatprep.subr.mxu0 0.0
        %555 = vmatpush1.xpose.msra.mxu0 0.0
        %556 = vmatprep.subr.mxu0 0.0
        %557 = vmatpush1.xpose.msra.mxu0 0.0
        %558 = vmatprep.subr.mxu0 0.0
        %559 = vmatpush1.xpose.msra.mxu0 0.0
        %560 = vmatprep.subr.mxu0 0.0
        %561 = vmatpush1.xpose.msra.mxu0 0.0
        %562 = vmatprep.subr.mxu0 0.0
        %563 = vmatpush1.xpose.msra.mxu0 0.0
        %564 = vmatprep.subr.mxu0 0.0
        %565 = vmatpush1.xpose.msra.mxu0 0.0
        %566 = vmatprep.subr.mxu0 0.0
        %567 = vmatpush1.xpose.msra.mxu0 0.0
        %568 = vmatprep.subr.mxu0 0.0
        %569 = vmatpush1.xpose.msra.mxu0 0.0
        %570 = vmatprep.subr.mxu0 0.0
        %571 = vmatpush1.xpose.msra.mxu0 0.0
        %572 = vmatprep.subr.mxu0 0.0
        %573 = vmatpush1.xpose.msra.mxu0 0.0
        %574 = vmatprep.subr.mxu0 0.0
        %575 = vmatpush1.xpose.msra.mxu0 0.0
        %576 = vmatprep.subr.mxu0 0.0
        %577 = vmatpush1.xpose.msra.mxu0 0.0
        %578 = vmatprep.subr.mxu0 0.0
        %579 = vmatpush1.xpose.msra.mxu0 0.0
        %580 = vmatprep.subr.mxu0 0.0
        %581 = vmatpush1.xpose.msra.mxu0 0.0
        %582 = vmatprep.subr.mxu0 0.0
        %583 = vmatpush1.xpose.msra.mxu0 0.0
        %584 = vmatprep.subr.mxu0 0.0
        %585 = vmatpush1.xpose.msra.mxu0 0.0
        %586 = vmatprep.subr.mxu0 0.0
        %587 = vmatpush1.xpose.msra.mxu0 0.0
        %588 = vmatprep.subr.mxu0 0.0
        %589 = vmatpush1.xpose.msra.mxu0 0.0
        %590 = vmatprep.subr.mxu0 0.0
        %591 = vmatpush1.xpose.msra.mxu0 0.0
        %592 = vmatprep.subr.mxu0 0.0
        %593 = vmatpush1.xpose.msra.mxu0 0.0
        %594 = vmatprep.subr.mxu0 0.0
        %595 = vmatpush1.xpose.msra.mxu0 0.0
        %596 = vmatprep.subr.mxu0 0.0
        %597 = vmatpush1.xpose.msra.mxu0 0.0
        %598 = vmatprep.subr.mxu0 0.0
        %599 = vmatpush1.xpose.msra.mxu0 0.0
        %600 = vmatprep.mubr.f32.mxu0 0.0
        %v601 = vand.u32 %v213, 4294901760
        %602 = vmatmul.mubr.f32.gmra.mrb[0].mxu0 %v601
        %v603 = vpop.f32.mrb[0].mxu0
        %v604 = vadd.f32 %v527, %v603
        %v605 = vpop.f32.mrb[0].mxu0
        %606 = vdwg.mxu0
        %607 = vmatprep.subr.mxu0 0.0
        %v608 = vand.u32 %v216, 4294901760
        %609 = vmatpush1.xpose.msra.mxu0 %v608
        %610 = vmatprep.subr.mxu0 0.0
        %v611 = vand.u32 %v219, 4294901760
        %612 = vmatpush1.xpose.msra.mxu0 %v611
        %613 = vmatprep.subr.mxu0 0.0
        %614 = vmatpush1.xpose.msra.mxu0 0.0
        %615 = vmatprep.subr.mxu0 0.0
        %616 = vmatpush1.xpose.msra.mxu0 0.0
        %617 = vmatprep.subr.mxu0 0.0
        %618 = vmatpush1.xpose.msra.mxu0 0.0
        %619 = vmatprep.subr.mxu0 0.0
        %620 = vmatpush1.xpose.msra.mxu0 0.0
        %621 = vmatprep.subr.mxu0 0.0
        %622 = vmatpush1.xpose.msra.mxu0 0.0
        %623 = vmatprep.subr.mxu0 0.0
        %624 = vmatpush1.xpose.msra.mxu0 0.0
        %625 = vmatprep.subr.mxu0 0.0
        %626 = vmatpush1.xpose.msra.mxu0 0.0
        %627 = vmatprep.subr.mxu0 0.0
        %628 = vmatpush1.xpose.msra.mxu0 0.0
        %629 = vmatprep.subr.mxu0 0.0
        %630 = vmatpush1.xpose.msra.mxu0 0.0
        %631 = vmatprep.subr.mxu0 0.0
        %632 = vmatpush1.xpose.msra.mxu0 0.0
        %633 = vmatprep.subr.mxu0 0.0
        %634 = vmatpush1.xpose.msra.mxu0 0.0
        %635 = vmatprep.subr.mxu0 0.0
        %636 = vmatpush1.xpose.msra.mxu0 0.0
        %637 = vmatprep.subr.mxu0 0.0
        %638 = vmatpush1.xpose.msra.mxu0 0.0
        %639 = vmatprep.subr.mxu0 0.0
        %640 = vmatpush1.xpose.msra.mxu0 0.0
        %641 = vmatprep.subr.mxu0 0.0
        %642 = vmatpush1.xpose.msra.mxu0 0.0
        %643 = vmatprep.subr.mxu0 0.0
        %644 = vmatpush1.xpose.msra.mxu0 0.0
        %645 = vmatprep.subr.mxu0 0.0
        %646 = vmatpush1.xpose.msra.mxu0 0.0
        %647 = vmatprep.subr.mxu0 0.0
        %648 = vmatpush1.xpose.msra.mxu0 0.0
        %649 = vmatprep.subr.mxu0 0.0
        %650 = vmatpush1.xpose.msra.mxu0 0.0
        %651 = vmatprep.subr.mxu0 0.0
        %652 = vmatpush1.xpose.msra.mxu0 0.0
        %653 = vmatprep.subr.mxu0 0.0
        %654 = vmatpush1.xpose.msra.mxu0 0.0
        %655 = vmatprep.subr.mxu0 0.0
        %656 = vmatpush1.xpose.msra.mxu0 0.0
        %657 = vmatprep.subr.mxu0 0.0
        %658 = vmatpush1.xpose.msra.mxu0 0.0
        %659 = vmatprep.subr.mxu0 0.0
        %660 = vmatpush1.xpose.msra.mxu0 0.0
        %661 = vmatprep.subr.mxu0 0.0
        %662 = vmatpush1.xpose.msra.mxu0 0.0
        %663 = vmatprep.subr.mxu0 0.0
        %664 = vmatpush1.xpose.msra.mxu0 0.0
        %665 = vmatprep.subr.mxu0 0.0
        %666 = vmatpush1.xpose.msra.mxu0 0.0
        %667 = vmatprep.subr.mxu0 0.0
        %668 = vmatpush1.xpose.msra.mxu0 0.0
        %669 = vmatprep.subr.mxu0 0.0
        %670 = vmatpush1.xpose.msra.mxu0 0.0
        %671 = vmatprep.subr.mxu0 0.0
        %672 = vmatpush1.xpose.msra.mxu0 0.0
        %673 = vmatprep.mubr.f32.mxu0 0.0
        %v674 = vand.u32 %v213, 4294901760
        %675 = vmatmul.mubr.f32.gmra.mrb[0].mxu0 %v674
        %v676 = vpop.f32.mrb[0].mxu0
        %v677 = vadd.f32 %v604, %v676
        %v678 = vpop.f32.mrb[0].mxu0
        %679 = vdwg.mxu0
        %vm680 = vcmask 130048
        %681 = vst.msk [vmem:[%s200] sm:$0xff] %vm680, %v677
        %s682 = sand.u32 %s97, 1
        %s683 = scalar_lea.sflag [#allocation4], %s682
        %s684 = sand.u32 %s97, 1
        %s685 = smul.addr %s684, 8
        %s686 = scalar_lea.vmem [#allocation7], %s685
        // Predicated region
        $region41: #{slot_classifier_forward.1} parent=31 // pred_check
          %p687 = pneg %p107
        $region42: #{slot_classifier_forward.1} parent=31 // pred_check_branch
          %689 = sbr.rel (%p687) target = $region44
        $region43: #{slot_classifier_forward.1} parent=31 // pred_region
          %s691 = ssub.s32 128, 128
          %692 = vsyncadd %s683, %s691
          %s693 = smul.addr %s21, 128
          %s694 = scalar_lea.hbm %s3, %s693
          %s696 = sshll.u32 %s686, 4
          %s697 = int_to_ptr.vmem [resolvable:$true] %s696
          %699 = dma.vmem_to_hbm [thread:$0]  %s697, 128, %s694, %s683
        $region44: #{slot_classifier_forward.1} parent=31 // pred_fallthru
          _
      $region32: #{slot_classifier_forward.1} parent=5 // pred_fallthru
        _
      %p700 = scmp.le.s32.totalorder 2, %s16
      // Predicated region
      $region45: #{slot_classifier_forward.1} parent=5 // pred_check
        %p701 = pneg %p700
      $region46: #{slot_classifier_forward.1} parent=5 // pred_check_branch
        %703 = sbr.rel (%p701) target = $region48
      $region47: #{slot_classifier_forward.1} parent=5 // pred_region
        %s704 = ssub.s32 %s16, 2
        // Predicated region
        $region49: #{slot_classifier_forward.1} parent=47 // pred_check
          %p705 = pneg %p113
        $region50: #{slot_classifier_forward.1} parent=47 // pred_check_branch
          %707 = sbr.rel (%p705) target = $region52
        $region51: #{slot_classifier_forward.1} parent=47 // pred_region
          %s708 = sand.u32 %s98, 1
          %s709 = scalar_lea.sflag [#allocation4], %s708
          %s710 = sand.u32 %s98, 1
          %s711 = smul.addr %s710, 8
          %s712 = scalar_lea.vmem [#allocation7], %s711
          %713 = dma.done %s709, 128
        $region52: #{slot_classifier_forward.1} parent=47 // pred_fallthru
          _
      $region48: #{slot_classifier_forward.1} parent=5 // pred_fallthru
        _
    $region6: #{slot_classifier_forward.1} parent=1 // loop_footer
      %s20 = sadd.s32 1, %s16
    $region7: #{slot_classifier_forward.1} parent=1 // loop_footer_branch
      %15 = sbr.rel target = $region3
    $region8: #{slot_classifier_forward.1} parent=1 // loop_exit
      _
    %714 = vsyncpa [#allocation3], 1
    %s715 = scalar_lea.sflag [#allocation3], 1
    %716 = vsyncpa %s715, 1
    %717 = vsyncpa [#allocation6], 1
    %718 = vsyncpa [#allocation4], 1
    %s719 = scalar_lea.sflag [#allocation4], 1
    %720 = vsyncpa %s719, 1

</llo_original>
